<compile_context>
chip_gen: v5e
topology: v5e:2x2
jax: 0.10.0
libtpu: 0.0.40
codegen_flags: <defaults>
</compile_context>

<pallas_src>
import math
import functools

import jax
import jax.numpy as jnp
from jax.experimental import pallas as pl
from jax.experimental.pallas import tpu as pltpu


def _pos_embed_kernel(ids_ref, table_hbm, pe_ref, out_ref, gather_buf, copy_sem,
                      *, tile_t, vsz, scale, unroll):
    """One (batch row, time tile) per grid step.

    ids_ref:    [B, T_pad]      int32   SMEM (scalar prefetch)
    table_hbm:  [vsz, dsz]      f32     HBM (memory_space=pl.ANY, no auto-DMA)
    pe_ref:     [tile_t, dsz]   f32     VMEM tile of positional encodings
    out_ref:    [1, tile_t, dsz] f32    VMEM output tile
    gather_buf: [tile_t, dsz]   f32     VMEM scratch (gather destination)
    copy_sem:   scalar DMA semaphore shared by all row copies of this step
    """
    b = pl.program_id(0)
    tt = pl.program_id(1)
    base = tt * tile_t

    def row_copy(dst_row, src_row):
        return pltpu.make_async_copy(
            table_hbm.at[pl.ds(src_row, 1), :],
            gather_buf.at[pl.ds(dst_row, 1), :],
            copy_sem)

    # Issue one small row-DMA per token: HBM table row -> VMEM scratch row.
    @pl.loop(0, tile_t, unroll=unroll)
    def _(i):
        tok = ids_ref[b, base + i]
        tok = jnp.minimum(jnp.maximum(tok, 0), vsz - 1)  # clamp untrusted ids
        row_copy(i, tok).start()

    # Drain: each wait retires one row-sized copy on the shared semaphore.
    @pl.loop(0, tile_t, unroll=unroll)
    def _(i):
        row_copy(0, 0).wait()

    # Fused sqrt(dsz) scale + positional-encoding add: one VPU pass, one dense store.
    out_ref[0] = (gather_buf[...] * scale + pe_ref[...]).astype(out_ref.dtype)
    # TODO(synk): train-mode dropout (nn.Dropout(p)) not applied; eval-mode
    # dropout is the identity, which is what is implemented here.


def positional_lookup_embeddings(ids, table, pe, *, tile_tokens=256):
    """ids: [B, T] int; table: [vsz, dsz] f32 (row 0 zero); pe: [mxlen, dsz] f32."""
    B, T = ids.shape
    vsz, dsz = table.shape
    mxlen = pe.shape[0]

    # Time tiling: up to `tile_tokens` tokens per grid step, padded and sliced back.
    if T >= tile_tokens:
        tile_t = tile_tokens
        t_pad = pl.cdiv(T, tile_t) * tile_t
    else:
        tile_t = T
        t_pad = T
    nt = t_pad // tile_t

    ids_p = ids.astype(jnp.int32)
    if t_pad != T:
        ids_p = jnp.pad(ids_p, ((0, 0), (0, t_pad - T)))  # pad with padding idx 0

    pe_rows = min(t_pad, mxlen)
    pe_t = pe[:pe_rows]
    if pe_rows < t_pad:
        pe_t = jnp.pad(pe_t, ((0, t_pad - pe_rows), (0, 0)))

    kernel = functools.partial(
        _pos_embed_kernel,
        tile_t=tile_t,
        vsz=vsz,
        scale=math.sqrt(float(dsz)),
        unroll=tile_t <= 32,
    )

    out = pl.pallas_call(
        kernel,
        out_shape=jax.ShapeDtypeStruct((B, t_pad, dsz), table.dtype),
        grid_spec=pltpu.PrefetchScalarGridSpec(
            num_scalar_prefetch=1,                       # ids -> SMEM
            grid=(B, nt),
            in_specs=[
                pl.BlockSpec(memory_space=pl.ANY),       # table stays in HBM
                pl.BlockSpec((tile_t, dsz), lambda b, tt, ids: (tt, 0)),  # pe tile
            ],
            out_specs=pl.BlockSpec((1, tile_t, dsz), lambda b, tt, ids: (b, tt, 0)),
            scratch_shapes=[
                pltpu.VMEM((tile_t, dsz), table.dtype),  # gather destination
                pltpu.SemaphoreType.DMA,                 # shared row-copy semaphore
            ],
        ),
        compiler_params=pltpu.CompilerParams(
            dimension_semantics=("parallel", "parallel")),
    )(ids_p, table, pe_t)

    return out[:, :T] if t_pad != T else out


def make_positional_encoding(mxlen, dsz, max_timescale=10000.0):
    log_timescale_increment = math.log(max_timescale) / dsz
    inv_timescales = jnp.exp(
        jnp.arange(0, dsz, 2, dtype=jnp.float32) * -log_timescale_increment)
    position = jnp.arange(mxlen, dtype=jnp.float32)[:, None]
    pe = jnp.zeros((mxlen, dsz), dtype=jnp.float32)
    pe = pe.at[:, 0::2].set(jnp.sin(position * inv_timescales))
    pe = pe.at[:, 1::2].set(jnp.cos(position * inv_timescales))
    return pe


if __name__ == "__main__":
    B, T = 2, 8
    vsz, dsz = 64, 32
    mxlen = 64

    key = jax.random.PRNGKey(0)
    k_w, k_x = jax.random.split(key)

    # nn.Embedding(vsz, dsz, padding_idx=0): N(0,1) init, row 0 zeroed.
    table = jax.random.normal(k_w, (vsz, dsz), dtype=jnp.float32)
    table = table.at[0].set(0.0)

    pe = make_positional_encoding(mxlen, dsz)
    ids = jax.random.randint(k_x, (B, T), 0, vsz, dtype=jnp.int32)

    out = positional_lookup_embeddings(ids, table, pe)
    out = jax.block_until_ready(out)

    # reference check (plain JAX)
    ref = jnp.take(table, ids, axis=0) * math.sqrt(dsz) + pe[None, :T]
    assert out.shape == (B, T, dsz)
    assert jnp.allclose(out, ref, atol=1e-5, rtol=1e-5)

    print("KERNEL_OK")
</pallas_src>

<mosaic_0001>
module attributes {stable_mosaic.version = 11 : i64} {
  func.func @_pos_embed_kernel(%arg0: i32, %arg1: i32, %arg2: memref<2x8xi32, #tpu.memory_space<smem>>, %arg3: memref<64x32xf32, #tpu.memory_space<any>>, %arg4: memref<8x32xf32, #tpu.memory_space<vmem>>, %arg5: memref<1x8x32xf32, #tpu.memory_space<vmem>>, %arg6: memref<8x32xf32, #tpu.memory_space<vmem>>, %arg7: memref<!tpu.dma_semaphore, #tpu.memory_space<semaphore_mem>>) attributes {dimension_semantics = [#tpu.dimension_semantics<parallel>, #tpu.dimension_semantics<parallel>], iteration_bounds = array<i64: 2, 1>, scalar_prefetch = 1 : i64, scratch_operands = 2 : i64, tpu.core_type = #tpu.core_type<tc>, window_params = [{}, {transform_indices = @transform_1, window_bounds = array<i64: 8, 32>}, {transform_indices = @transform_2, window_bounds = array<i64: 1, 8, 32>}]} {
    %c8_i32 = arith.constant 8 : i32
    %0 = arith.muli %arg1, %c8_i32 : i32
    %c0_i32 = arith.constant 0 : i32
    %c1_i32 = arith.constant 1 : i32
    %1 = arith.muli %c0_i32, %c1_i32 : i32
    %c0_i32_0 = arith.constant 0 : i32
    %2 = arith.addi %c0_i32_0, %1 : i32
    %3 = arith.addi %0, %2 : i32
    %4 = arith.index_cast %arg0 : i32 to index
    %5 = arith.index_cast %3 : i32 to index
    %6 = memref.load %arg2[%4, %5] : memref<2x8xi32, #tpu.memory_space<smem>>
    %c0_i32_1 = arith.constant 0 : i32
    %7 = arith.maxsi %6, %c0_i32_1 : i32
    %c63_i32 = arith.constant 63 : i32
    %8 = arith.minsi %7, %c63_i32 : i32
    %c0_i32_2 = arith.constant 0 : i32
    %9 = tpu.memref_slice %arg3[%8, %c0_i32_2] : memref<64x32xf32, #tpu.memory_space<any>> -> memref<1x32xf32, #tpu.memory_space<any>>
    %c0_i32_3 = arith.constant 0 : i32
    %10 = tpu.memref_slice %arg6[%2, %c0_i32_3] : memref<8x32xf32, #tpu.memory_space<vmem>> -> memref<1x32xf32, #tpu.memory_space<vmem>>
    tpu.enqueue_dma source(%9 : memref<1x32xf32, #tpu.memory_space<any>>) target(%10 : memref<1x32xf32, #tpu.memory_space<vmem>>) target_semaphore(%arg7 : memref<!tpu.dma_semaphore, #tpu.memory_space<semaphore_mem>>)
    %c1_i32_4 = arith.constant 1 : i32
    %c1_i32_5 = arith.constant 1 : i32
    %11 = arith.muli %c1_i32_4, %c1_i32_5 : i32
    %c0_i32_6 = arith.constant 0 : i32
    %12 = arith.addi %c0_i32_6, %11 : i32
    %13 = arith.addi %0, %12 : i32
    %14 = arith.index_cast %arg0 : i32 to index
    %15 = arith.index_cast %13 : i32 to index
    %16 = memref.load %arg2[%14, %15] : memref<2x8xi32, #tpu.memory_space<smem>>
    %c0_i32_7 = arith.constant 0 : i32
    %17 = arith.maxsi %16, %c0_i32_7 : i32
    %c63_i32_8 = arith.constant 63 : i32
    %18 = arith.minsi %17, %c63_i32_8 : i32
    %c0_i32_9 = arith.constant 0 : i32
    %19 = tpu.memref_slice %arg3[%18, %c0_i32_9] : memref<64x32xf32, #tpu.memory_space<any>> -> memref<1x32xf32, #tpu.memory_space<any>>
    %c0_i32_10 = arith.constant 0 : i32
    %20 = tpu.memref_slice %arg6[%12, %c0_i32_10] : memref<8x32xf32, #tpu.memory_space<vmem>> -> memref<1x32xf32, #tpu.memory_space<vmem>>
    tpu.enqueue_dma source(%19 : memref<1x32xf32, #tpu.memory_space<any>>) target(%20 : memref<1x32xf32, #tpu.memory_space<vmem>>) target_semaphore(%arg7 : memref<!tpu.dma_semaphore, #tpu.memory_space<semaphore_mem>>)
    %c2_i32 = arith.constant 2 : i32
    %c1_i32_11 = arith.constant 1 : i32
    %21 = arith.muli %c2_i32, %c1_i32_11 : i32
    %c0_i32_12 = arith.constant 0 : i32
    %22 = arith.addi %c0_i32_12, %21 : i32
    %23 = arith.addi %0, %22 : i32
    %24 = arith.index_cast %arg0 : i32 to index
    %25 = arith.index_cast %23 : i32 to index
    %26 = memref.load %arg2[%24, %25] : memref<2x8xi32, #tpu.memory_space<smem>>
    %c0_i32_13 = arith.constant 0 : i32
    %27 = arith.maxsi %26, %c0_i32_13 : i32
    %c63_i32_14 = arith.constant 63 : i32
    %28 = arith.minsi %27, %c63_i32_14 : i32
    %c0_i32_15 = arith.constant 0 : i32
    %29 = tpu.memref_slice %arg3[%28, %c0_i32_15] : memref<64x32xf32, #tpu.memory_space<any>> -> memref<1x32xf32, #tpu.memory_space<any>>
    %c0_i32_16 = arith.constant 0 : i32
    %30 = tpu.memref_slice %arg6[%22, %c0_i32_16] : memref<8x32xf32, #tpu.memory_space<vmem>> -> memref<1x32xf32, #tpu.memory_space<vmem>>
    tpu.enqueue_dma source(%29 : memref<1x32xf32, #tpu.memory_space<any>>) target(%30 : memref<1x32xf32, #tpu.memory_space<vmem>>) target_semaphore(%arg7 : memref<!tpu.dma_semaphore, #tpu.memory_space<semaphore_mem>>)
    %c3_i32 = arith.constant 3 : i32
    %c1_i32_17 = arith.constant 1 : i32
    %31 = arith.muli %c3_i32, %c1_i32_17 : i32
    %c0_i32_18 = arith.constant 0 : i32
    %32 = arith.addi %c0_i32_18, %31 : i32
    %33 = arith.addi %0, %32 : i32
    %34 = arith.index_cast %arg0 : i32 to index
    %35 = arith.index_cast %33 : i32 to index
    %36 = memref.load %arg2[%34, %35] : memref<2x8xi32, #tpu.memory_space<smem>>
    %c0_i32_19 = arith.constant 0 : i32
    %37 = arith.maxsi %36, %c0_i32_19 : i32
    %c63_i32_20 = arith.constant 63 : i32
    %38 = arith.minsi %37, %c63_i32_20 : i32
    %c0_i32_21 = arith.constant 0 : i32
    %39 = tpu.memref_slice %arg3[%38, %c0_i32_21] : memref<64x32xf32, #tpu.memory_space<any>> -> memref<1x32xf32, #tpu.memory_space<any>>
    %c0_i32_22 = arith.constant 0 : i32
    %40 = tpu.memref_slice %arg6[%32, %c0_i32_22] : memref<8x32xf32, #tpu.memory_space<vmem>> -> memref<1x32xf32, #tpu.memory_space<vmem>>
    tpu.enqueue_dma source(%39 : memref<1x32xf32, #tpu.memory_space<any>>) target(%40 : memref<1x32xf32, #tpu.memory_space<vmem>>) target_semaphore(%arg7 : memref<!tpu.dma_semaphore, #tpu.memory_space<semaphore_mem>>)
    %c4_i32 = arith.constant 4 : i32
    %c1_i32_23 = arith.constant 1 : i32
    %41 = arith.muli %c4_i32, %c1_i32_23 : i32
    %c0_i32_24 = arith.constant 0 : i32
    %42 = arith.addi %c0_i32_24, %41 : i32
    %43 = arith.addi %0, %42 : i32
    %44 = arith.index_cast %arg0 : i32 to index
    %45 = arith.index_cast %43 : i32 to index
    %46 = memref.load %arg2[%44, %45] : memref<2x8xi32, #tpu.memory_space<smem>>
    %c0_i32_25 = arith.constant 0 : i32
    %47 = arith.maxsi %46, %c0_i32_25 : i32
    %c63_i32_26 = arith.constant 63 : i32
    %48 = arith.minsi %47, %c63_i32_26 : i32
    %c0_i32_27 = arith.constant 0 : i32
    %49 = tpu.memref_slice %arg3[%48, %c0_i32_27] : memref<64x32xf32, #tpu.memory_space<any>> -> memref<1x32xf32, #tpu.memory_space<any>>
    %c0_i32_28 = arith.constant 0 : i32
    %50 = tpu.memref_slice %arg6[%42, %c0_i32_28] : memref<8x32xf32, #tpu.memory_space<vmem>> -> memref<1x32xf32, #tpu.memory_space<vmem>>
    tpu.enqueue_dma source(%49 : memref<1x32xf32, #tpu.memory_space<any>>) target(%50 : memref<1x32xf32, #tpu.memory_space<vmem>>) target_semaphore(%arg7 : memref<!tpu.dma_semaphore, #tpu.memory_space<semaphore_mem>>)
    %c5_i32 = arith.constant 5 : i32
    %c1_i32_29 = arith.constant 1 : i32
    %51 = arith.muli %c5_i32, %c1_i32_29 : i32
    %c0_i32_30 = arith.constant 0 : i32
    %52 = arith.addi %c0_i32_30, %51 : i32
    %53 = arith.addi %0, %52 : i32
    %54 = arith.index_cast %arg0 : i32 to index
    %55 = arith.index_cast %53 : i32 to index
    %56 = memref.load %arg2[%54, %55] : memref<2x8xi32, #tpu.memory_space<smem>>
    %c0_i32_31 = arith.constant 0 : i32
    %57 = arith.maxsi %56, %c0_i32_31 : i32
    %c63_i32_32 = arith.constant 63 : i32
    %58 = arith.minsi %57, %c63_i32_32 : i32
    %c0_i32_33 = arith.constant 0 : i32
    %59 = tpu.memref_slice %arg3[%58, %c0_i32_33] : memref<64x32xf32, #tpu.memory_space<any>> -> memref<1x32xf32, #tpu.memory_space<any>>
    %c0_i32_34 = arith.constant 0 : i32
    %60 = tpu.memref_slice %arg6[%52, %c0_i32_34] : memref<8x32xf32, #tpu.memory_space<vmem>> -> memref<1x32xf32, #tpu.memory_space<vmem>>
    tpu.enqueue_dma source(%59 : memref<1x32xf32, #tpu.memory_space<any>>) target(%60 : memref<1x32xf32, #tpu.memory_space<vmem>>) target_semaphore(%arg7 : memref<!tpu.dma_semaphore, #tpu.memory_space<semaphore_mem>>)
    %c6_i32 = arith.constant 6 : i32
    %c1_i32_35 = arith.constant 1 : i32
    %61 = arith.muli %c6_i32, %c1_i32_35 : i32
    %c0_i32_36 = arith.constant 0 : i32
    %62 = arith.addi %c0_i32_36, %61 : i32
    %63 = arith.addi %0, %62 : i32
    %64 = arith.index_cast %arg0 : i32 to index
    %65 = arith.index_cast %63 : i32 to index
    %66 = memref.load %arg2[%64, %65] : memref<2x8xi32, #tpu.memory_space<smem>>
    %c0_i32_37 = arith.constant 0 : i32
    %67 = arith.maxsi %66, %c0_i32_37 : i32
    %c63_i32_38 = arith.constant 63 : i32
    %68 = arith.minsi %67, %c63_i32_38 : i32
    %c0_i32_39 = arith.constant 0 : i32
    %69 = tpu.memref_slice %arg3[%68, %c0_i32_39] : memref<64x32xf32, #tpu.memory_space<any>> -> memref<1x32xf32, #tpu.memory_space<any>>
    %c0_i32_40 = arith.constant 0 : i32
    %70 = tpu.memref_slice %arg6[%62, %c0_i32_40] : memref<8x32xf32, #tpu.memory_space<vmem>> -> memref<1x32xf32, #tpu.memory_space<vmem>>
    tpu.enqueue_dma source(%69 : memref<1x32xf32, #tpu.memory_space<any>>) target(%70 : memref<1x32xf32, #tpu.memory_space<vmem>>) target_semaphore(%arg7 : memref<!tpu.dma_semaphore, #tpu.memory_space<semaphore_mem>>)
    %c7_i32 = arith.constant 7 : i32
    %c1_i32_41 = arith.constant 1 : i32
    %71 = arith.muli %c7_i32, %c1_i32_41 : i32
    %c0_i32_42 = arith.constant 0 : i32
    %72 = arith.addi %c0_i32_42, %71 : i32
    %73 = arith.addi %0, %72 : i32
    %74 = arith.index_cast %arg0 : i32 to index
    %75 = arith.index_cast %73 : i32 to index
    %76 = memref.load %arg2[%74, %75] : memref<2x8xi32, #tpu.memory_space<smem>>
    %c0_i32_43 = arith.constant 0 : i32
    %77 = arith.maxsi %76, %c0_i32_43 : i32
    %c63_i32_44 = arith.constant 63 : i32
    %78 = arith.minsi %77, %c63_i32_44 : i32
    %c0_i32_45 = arith.constant 0 : i32
    %79 = tpu.memref_slice %arg3[%78, %c0_i32_45] : memref<64x32xf32, #tpu.memory_space<any>> -> memref<1x32xf32, #tpu.memory_space<any>>
    %c0_i32_46 = arith.constant 0 : i32
    %80 = tpu.memref_slice %arg6[%72, %c0_i32_46] : memref<8x32xf32, #tpu.memory_space<vmem>> -> memref<1x32xf32, #tpu.memory_space<vmem>>
    tpu.enqueue_dma source(%79 : memref<1x32xf32, #tpu.memory_space<any>>) target(%80 : memref<1x32xf32, #tpu.memory_space<vmem>>) target_semaphore(%arg7 : memref<!tpu.dma_semaphore, #tpu.memory_space<semaphore_mem>>)
    %c8_i32_47 = arith.constant 8 : i32
    %c0_i32_48 = arith.constant 0 : i32
    %c0_i32_49 = arith.constant 0 : i32
    %c0_i32_50 = arith.constant 0 : i32
    %81 = tpu.memref_slice %arg3[%c0_i32_49, %c0_i32_50] : memref<64x32xf32, #tpu.memory_space<any>> -> memref<1x32xf32, #tpu.memory_space<any>>
    %c0_i32_51 = arith.constant 0 : i32
    %c0_i32_52 = arith.constant 0 : i32
    %82 = tpu.memref_slice %arg6[%c0_i32_51, %c0_i32_52] : memref<8x32xf32, #tpu.memory_space<vmem>> -> memref<1x32xf32, #tpu.memory_space<vmem>>
    tpu.wait_dma2 semaphore(%arg7 : memref<!tpu.dma_semaphore, #tpu.memory_space<semaphore_mem>>) src(%81 : memref<1x32xf32, #tpu.memory_space<any>>) dst(%82 : memref<1x32xf32, #tpu.memory_space<vmem>>)
    %c1_i32_53 = arith.constant 1 : i32
    %c0_i32_54 = arith.constant 0 : i32
    %c0_i32_55 = arith.constant 0 : i32
    %83 = tpu.memref_slice %arg3[%c0_i32_54, %c0_i32_55] : memref<64x32xf32, #tpu.memory_space<any>> -> memref<1x32xf32, #tpu.memory_space<any>>
    %c0_i32_56 = arith.constant 0 : i32
    %c0_i32_57 = arith.constant 0 : i32
    %84 = tpu.memref_slice %arg6[%c0_i32_56, %c0_i32_57] : memref<8x32xf32, #tpu.memory_space<vmem>> -> memref<1x32xf32, #tpu.memory_space<vmem>>
    tpu.wait_dma2 semaphore(%arg7 : memref<!tpu.dma_semaphore, #tpu.memory_space<semaphore_mem>>) src(%83 : memref<1x32xf32, #tpu.memory_space<any>>) dst(%84 : memref<1x32xf32, #tpu.memory_space<vmem>>)
    %c2_i32_58 = arith.constant 2 : i32
    %c0_i32_59 = arith.constant 0 : i32
    %c0_i32_60 = arith.constant 0 : i32
    %85 = tpu.memref_slice %arg3[%c0_i32_59, %c0_i32_60] : memref<64x32xf32, #tpu.memory_space<any>> -> memref<1x32xf32, #tpu.memory_space<any>>
    %c0_i32_61 = arith.constant 0 : i32
    %c0_i32_62 = arith.constant 0 : i32
    %86 = tpu.memref_slice %arg6[%c0_i32_61, %c0_i32_62] : memref<8x32xf32, #tpu.memory_space<vmem>> -> memref<1x32xf32, #tpu.memory_space<vmem>>
    tpu.wait_dma2 semaphore(%arg7 : memref<!tpu.dma_semaphore, #tpu.memory_space<semaphore_mem>>) src(%85 : memref<1x32xf32, #tpu.memory_space<any>>) dst(%86 : memref<1x32xf32, #tpu.memory_space<vmem>>)
    %c3_i32_63 = arith.constant 3 : i32
    %c0_i32_64 = arith.constant 0 : i32
    %c0_i32_65 = arith.constant 0 : i32
    %87 = tpu.memref_slice %arg3[%c0_i32_64, %c0_i32_65] : memref<64x32xf32, #tpu.memory_space<any>> -> memref<1x32xf32, #tpu.memory_space<any>>
    %c0_i32_66 = arith.constant 0 : i32
    %c0_i32_67 = arith.constant 0 : i32
    %88 = tpu.memref_slice %arg6[%c0_i32_66, %c0_i32_67] : memref<8x32xf32, #tpu.memory_space<vmem>> -> memref<1x32xf32, #tpu.memory_space<vmem>>
    tpu.wait_dma2 semaphore(%arg7 : memref<!tpu.dma_semaphore, #tpu.memory_space<semaphore_mem>>) src(%87 : memref<1x32xf32, #tpu.memory_space<any>>) dst(%88 : memref<1x32xf32, #tpu.memory_space<vmem>>)
    %c4_i32_68 = arith.constant 4 : i32
    %c0_i32_69 = arith.constant 0 : i32
    %c0_i32_70 = arith.constant 0 : i32
    %89 = tpu.memref_slice %arg3[%c0_i32_69, %c0_i32_70] : memref<64x32xf32, #tpu.memory_space<any>> -> memref<1x32xf32, #tpu.memory_space<any>>
    %c0_i32_71 = arith.constant 0 : i32
    %c0_i32_72 = arith.constant 0 : i32
    %90 = tpu.memref_slice %arg6[%c0_i32_71, %c0_i32_72] : memref<8x32xf32, #tpu.memory_space<vmem>> -> memref<1x32xf32, #tpu.memory_space<vmem>>
    tpu.wait_dma2 semaphore(%arg7 : memref<!tpu.dma_semaphore, #tpu.memory_space<semaphore_mem>>) src(%89 : memref<1x32xf32, #tpu.memory_space<any>>) dst(%90 : memref<1x32xf32, #tpu.memory_space<vmem>>)
    %c5_i32_73 = arith.constant 5 : i32
    %c0_i32_74 = arith.constant 0 : i32
    %c0_i32_75 = arith.constant 0 : i32
    %91 = tpu.memref_slice %arg3[%c0_i32_74, %c0_i32_75] : memref<64x32xf32, #tpu.memory_space<any>> -> memref<1x32xf32, #tpu.memory_space<any>>
    %c0_i32_76 = arith.constant 0 : i32
    %c0_i32_77 = arith.constant 0 : i32
    %92 = tpu.memref_slice %arg6[%c0_i32_76, %c0_i32_77] : memref<8x32xf32, #tpu.memory_space<vmem>> -> memref<1x32xf32, #tpu.memory_space<vmem>>
    tpu.wait_dma2 semaphore(%arg7 : memref<!tpu.dma_semaphore, #tpu.memory_space<semaphore_mem>>) src(%91 : memref<1x32xf32, #tpu.memory_space<any>>) dst(%92 : memref<1x32xf32, #tpu.memory_space<vmem>>)
    %c6_i32_78 = arith.constant 6 : i32
    %c0_i32_79 = arith.constant 0 : i32
    %c0_i32_80 = arith.constant 0 : i32
    %93 = tpu.memref_slice %arg3[%c0_i32_79, %c0_i32_80] : memref<64x32xf32, #tpu.memory_space<any>> -> memref<1x32xf32, #tpu.memory_space<any>>
    %c0_i32_81 = arith.constant 0 : i32
    %c0_i32_82 = arith.constant 0 : i32
    %94 = tpu.memref_slice %arg6[%c0_i32_81, %c0_i32_82] : memref<8x32xf32, #tpu.memory_space<vmem>> -> memref<1x32xf32, #tpu.memory_space<vmem>>
    tpu.wait_dma2 semaphore(%arg7 : memref<!tpu.dma_semaphore, #tpu.memory_space<semaphore_mem>>) src(%93 : memref<1x32xf32, #tpu.memory_space<any>>) dst(%94 : memref<1x32xf32, #tpu.memory_space<vmem>>)
    %c7_i32_83 = arith.constant 7 : i32
    %c0_i32_84 = arith.constant 0 : i32
    %c0_i32_85 = arith.constant 0 : i32
    %95 = tpu.memref_slice %arg3[%c0_i32_84, %c0_i32_85] : memref<64x32xf32, #tpu.memory_space<any>> -> memref<1x32xf32, #tpu.memory_space<any>>
    %c0_i32_86 = arith.constant 0 : i32
    %c0_i32_87 = arith.constant 0 : i32
    %96 = tpu.memref_slice %arg6[%c0_i32_86, %c0_i32_87] : memref<8x32xf32, #tpu.memory_space<vmem>> -> memref<1x32xf32, #tpu.memory_space<vmem>>
    tpu.wait_dma2 semaphore(%arg7 : memref<!tpu.dma_semaphore, #tpu.memory_space<semaphore_mem>>) src(%95 : memref<1x32xf32, #tpu.memory_space<any>>) dst(%96 : memref<1x32xf32, #tpu.memory_space<vmem>>)
    %c0 = arith.constant 0 : index
    %c0_88 = arith.constant 0 : index
    %97 = vector.load %arg6[%c0, %c0_88] : memref<8x32xf32, #tpu.memory_space<vmem>>, vector<8x32xf32>
    %cst = arith.constant 5.65685415 : f32
    %98 = vector.broadcast %cst : f32 to vector<8x32xf32>
    %99 = arith.mulf %97, %98 : vector<8x32xf32>
    %c0_89 = arith.constant 0 : index
    %c0_90 = arith.constant 0 : index
    %100 = vector.load %arg4[%c0_89, %c0_90] : memref<8x32xf32, #tpu.memory_space<vmem>>, vector<8x32xf32>
    %101 = arith.addf %99, %100 : vector<8x32xf32>
    %c0_91 = arith.constant 0 : index
    %c0_92 = arith.constant 0 : index
    %c0_93 = arith.constant 0 : index
    %102 = vector.load %arg5[%c0_91, %c0_92, %c0_93] : memref<1x8x32xf32, #tpu.memory_space<vmem>>, vector<1x8x32xf32>
    %103 = vector.shape_cast %102 : vector<1x8x32xf32> to vector<8x32xf32>
    %104 = vector.shape_cast %101 : vector<8x32xf32> to vector<1x8x32xf32>
    tpu.vector_store %arg5[%c0_91, %c0_92, %c0_93], %104 {strides = array<i32>} : memref<1x8x32xf32, #tpu.memory_space<vmem>>, vector<1x8x32xf32>,
    return
  }
  func.func @transform_1(%arg0: i32, %arg1: i32, %arg2: memref<2x8xi32, #tpu.memory_space<smem>>) -> (i32, i32) {
    %c0_i32 = arith.constant 0 : i32
    %c0_i32_0 = arith.constant 0 : i32
    return %arg1, %c0_i32 : i32, i32
  }
  func.func @transform_2(%arg0: i32, %arg1: i32, %arg2: memref<2x8xi32, #tpu.memory_space<smem>>) -> (i32, i32, i32) {
    %c0_i32 = arith.constant 0 : i32
    %c0_i32_0 = arith.constant 0 : i32
    return %arg0, %arg1, %c0_i32 : i32, i32, i32
  }
}

</mosaic_0001>

<llo_original>
// kernel: tpu_custom_call.1
$region0: #{tpu_custom_call.1}
  #allocation0 [shape = 'u32[]', space=smem, size = 0x4, offset = 0x4, fixed_abs, tag = 'smem constant byte address 0x4 - core index']
  #allocation1 [shape = 'u32[72,128]{1,0:T(1,128)}', space=vmem, size = 0x9000, scoped, tag = 'internal scratch']
  #allocation2 [shape = 'f32[8,32]{1,0:T(8,128)}', space=vmem, size = 0x1000, scoped, tag = 'scratch operand']
  #allocation3 [shape = 's32[1]{0}', space=sflag, size = 0x4, scoped, tag = 'scratch operand']
  #allocation4 [shape = 's32[1]{0}', space=sflag, size = 0x4, scoped, tag = 'scoped memory for tpu_custom_call.1']
  #allocation5 [shape = 'u8[1024]{0}', space=smem, size = 0x400, scoped, tag = 'prefetched SMEM operand 0']
  #allocation8 [shape = 's32[]', space=sflag, size = 0x4, offset = 0, fixed_abs, tag = 'sflag constant byte address 0x0 - dummy sync flag']
  #allocation9 [shape = 's32[]', space=sflag, size = 0x4, offset = 0, fixed_abs, tag = 'sflag constant byte address 0x0 - dummy sync flag']
  #allocation10 [shape = 's32[]', space=sflag, size = 0x4, offset = 0, fixed_abs, tag = 'sflag constant byte address 0x0 - dummy sync flag']
  #allocation11 [shape = 's32[]', space=sflag, size = 0x4, offset = 0, fixed_abs, tag = 'sflag constant byte address 0x0 - dummy sync flag']
  #allocation12 [shape = 's32[]', space=sflag, size = 0x4, offset = 0, fixed_abs, tag = 'sflag constant byte address 0x0 - dummy sync flag']
  #allocation13 [shape = 's32[]', space=sflag, size = 0x4, offset = 0, fixed_abs, tag = 'sflag constant byte address 0x0 - dummy sync flag']
  #allocation14 [shape = 's32[]', space=sflag, size = 0x4, offset = 0, fixed_abs, tag = 'sflag constant byte address 0x0 - dummy sync flag']
  #allocation15 [shape = 's32[]', space=sflag, size = 0x4, offset = 0, fixed_abs, tag = 'sflag constant byte address 0x0 - dummy sync flag']
  %s0 = inlined_call_operand.vmem [shape: s32[2,8], index: 0, kind: input, shape index: {}]
  %s1 = inlined_call_operand.vmem [shape: f32[64,32], index: 1, kind: input, shape index: {}]
  %s2 = inlined_call_operand.vmem [shape: f32[8,32], index: 2, kind: input, shape index: {}]
  %s3 = inlined_call_operand.hbm [shape: f32[2,8,32], index: 3, kind: output, shape index: {}]
  %s4 = sld [smem:[#allocation0]]
  $region277: #{tpu_custom_call.1} parent=0
    _
  %s6 = ssub.s32 1, %s4
  %s7 = scalar_select 0, %s6, %s4
  %s9 = sshll.u32 %s0, 4
  %s10 = int_to_ptr.vmem [resolvable:$true] %s9
  %12 = dma.vmem_to_smem %s10, 32, [#allocation5], [#allocation4]
  %14 = dma.done [#allocation4], 32
  %15 = sfence
  $region1: #{tpu_custom_call.1} parent=0
    #allocation6 [shape = 'u8[8192]{0}', space=vmem, size = 0x2000, scoped, tag = 'output window, operand 0']
    #allocation7 [shape = 's32[2]{0}', space=sflag, size = 0x8, scoped, tag = 'scoped memory for tpu_custom_call.1']
    %16 = vsyncpa [#allocation7], 0
    %s17 = scalar_lea.sflag [#allocation7], 1
    %18 = vsyncpa %s17, 0
    loop: start=0, step=1, limit=4
    $region2: #{tpu_custom_call.1} parent=1 // loop_pre_header
      _
    $region3: #{tpu_custom_call.1} parent=1 // loop_header
      %s20 = sphi 0, %s24
      %p21 = scmp.ge.s32.totalorder %s20, 4
      %s27 = sphi 0, %s39
      %s28 = sphi 0, %s35
      %s29 = sphi 0, %s27
      %s30 = sphi 0, %s28
      %s31 = sphi 0, %s29
      %s32 = sphi 0, %s30
      %s42 = sphi 0, %s44
      %s45 = sphi 0, %s42
      %s46 = sphi 0, %s45
      %s62 = sphi 0, %s46
      %s70 = sphi 0, %s72
      %s73 = sphi 0, %s70
      %s74 = sphi 0, %s73
      %s90 = sphi 0, %s74
    $region4: #{tpu_custom_call.1} parent=1 // loop_header_branch
      %23 = sbr.rel (%p21) target = $region8
    $region5: #{tpu_custom_call.1} parent=1 // loop_body
      %s25 = ssub.s32 %s20, 1
      %s26 = ssub.s32 %s20, 2
      %s33 = sadd.s32 1, %s28
      %p34 = scmp.ge.s32.totalorder %s33, 1
      %s35 = scalar_select %p34, 0, %s33
      %s36 = sadd.s32 1, %s27
      %s37 = scalar_select %p34, %s36, %s27
      %p38 = scmp.ge.s32.totalorder %s37, 2
      %s39 = scalar_select %p38, 0, %s37
      %s40 = ssub.s32 %s28, %s35
      %p41 = scmp.eq.s32.totalorder %s40, 0
      %s43 = sadd.s32 %s42, 1
      %s44 = scalar_select %p41, %s42, %s43
      %p47 = pneg %p41
      %p48 = scmp.eq.s32.totalorder %s20, 1
      %p49 = por %p47, %p48
      %p50 = scmp.ne.s32.totalorder %s42, %s45
      %p51 = scmp.eq.s32.totalorder %s20, 0
      %p52 = por %p50, %p51
      %p53 = scmp.ne.s32.totalorder %s42, %s45
      %p54 = scmp.eq.s32.totalorder %s25, 1
      %p55 = por %p53, %p54
      %p56 = scmp.ne.s32.totalorder %s45, %s46
      %p57 = scmp.eq.s32.totalorder %s25, 0
      %p58 = por %p56, %p57
      %p59 = scmp.ne.s32.totalorder %s45, %s46
      %p60 = scmp.eq.s32.totalorder %s26, 1
      %p61 = por %p59, %p60
      %p63 = scmp.ne.s32.totalorder %s46, %s62
      %p64 = scmp.eq.s32.totalorder %s26, 0
      %p65 = por %p63, %p64
      %s66 = ssub.s32 %s27, %s39
      %s67 = ssub.s32 %s28, %s35
      %s68 = sor.u32 %s66, %s67
      %p69 = scmp.eq.s32.totalorder %s68, 0
      %s71 = sadd.s32 %s70, 1
      %s72 = scalar_select %p69, %s70, %s71
      %p75 = pneg %p69
      %p76 = scmp.eq.s32.totalorder %s20, 1
      %p77 = por %p75, %p76
      %p78 = scmp.ne.s32.totalorder %s70, %s73
      %p79 = scmp.eq.s32.totalorder %s20, 0
      %p80 = por %p78, %p79
      %p81 = scmp.ne.s32.totalorder %s70, %s73
      %p82 = scmp.eq.s32.totalorder %s25, 1
      %p83 = por %p81, %p82
      %p84 = scmp.ne.s32.totalorder %s73, %s74
      %p85 = scmp.eq.s32.totalorder %s25, 0
      %p86 = por %p84, %p85
      %p87 = scmp.ne.s32.totalorder %s73, %s74
      %p88 = scmp.eq.s32.totalorder %s26, 1
      %p89 = por %p87, %p88
      %p91 = scmp.ne.s32.totalorder %s74, %s90
      %p92 = scmp.eq.s32.totalorder %s26, 0
      %p93 = por %p91, %p92
      %p94 = scmp.le.s32.totalorder 1, %s20
      %p95 = scmp.lt.s32.totalorder %s20, 3
      %p96 = pnand %p94, %p95
      %p97 = pneg %p96
      // Predicated region
      $region9: #{tpu_custom_call.1} parent=5 // pred_check
        _
      $region10: #{tpu_custom_call.1} parent=5 // pred_check_branch
        %99 = sbr.rel (%p96) target = $region12
      $region11: #{tpu_custom_call.1} parent=5 // pred_region
        %s100 = ssub.s32 %s20, 1
        // Predicated region
        $region13: #{tpu_custom_call.1} parent=11 // pred_check
          %p101 = pneg %p58
        $region14: #{tpu_custom_call.1} parent=11 // pred_check_branch
          %103 = sbr.rel (%p101) target = $region16
        $region15: #{tpu_custom_call.1} parent=11 // pred_region
          %p104 = scmp.lt.s32.totalorder %s30, 0
          %s105 = scalar_select %p104, %s30, 0
          %s106 = smul.addr %s105, 8
          %s107 = scalar_lea.vmem %s2, %s106
        $region16: #{tpu_custom_call.1} parent=11 // pred_fallthru
          _
      $region12: #{tpu_custom_call.1} parent=5 // pred_fallthru
        _
      %p108 = scmp.lt.s32.totalorder %s20, 2
      // Predicated region
      $region17: #{tpu_custom_call.1} parent=5 // pred_check
        %p109 = pneg %p108
      $region18: #{tpu_custom_call.1} parent=5 // pred_check_branch
        %111 = sbr.rel (%p109) target = $region20
      $region19: #{tpu_custom_call.1} parent=5 // pred_region
        _
      $region20: #{tpu_custom_call.1} parent=5 // pred_fallthru
        _
      %p112 = scmp.le.s32.totalorder 1, %s20
      %p113 = scmp.lt.s32.totalorder %s20, 3
      %p114 = pnand %p112, %p113
      %p115 = pneg %p114
      // Predicated region
      $region21: #{tpu_custom_call.1} parent=5 // pred_check
        _
      $region22: #{tpu_custom_call.1} parent=5 // pred_check_branch
        %117 = sbr.rel (%p114) target = $region24
      $region23: #{tpu_custom_call.1} parent=5 // pred_region
        %s118 = ssub.s32 %s20, 1
        %p119 = scmp.lt.s32.totalorder %s30, 0
        %s120 = scalar_select %p119, %s30, 0
        %s121 = smul.addr %s120, 8
        %s122 = scalar_lea.vmem %s2, %s121
        %p123 = pneg %p58
        %p124 = pneg %p55
        %p125 = pneg %p86
        %p126 = pneg %p83
        %s127 = sand.u32 %s73, 1
        %s128 = scalar_lea.sflag [#allocation7], %s127
        %s129 = sand.u32 %s73, 1
        %s130 = smul.addr %s129, 8
        %s131 = scalar_lea.vmem [#allocation6], %s130
        %p132 = scmp.lt.s32.totalorder %s30, 0
        %s133 = scalar_select %p132, %s30, 0
        %s134 = smul.addr %s133, 8
        %s135 = scalar_lea.vmem %s2, %s134
        %s136 = smul.u32 %s30, 8
        %s137 = sshra.s32 %s136, 7
        %s138 = sand.u32 %s136, 127
        %s139 = sadd.s32 %s137, %s29
        %s140 = smul.u32 %s139, 128
        %s141 = sshra.s32 %s136, 7
        %s142 = sand.u32 %s136, 127
        %s143 = sadd.s32 %s140, %s142
        %s144 = sld [smem:[#allocation5 + %s143]]
        %p145 = scmp.gt.s32.totalorder %s144, 0
        %s146 = scalar_select %p145, %s144, 0
        %p147 = scmp.lt.s32.totalorder %s146, 63
        %s148 = scalar_select %p147, %s146, 63
        %s149 = scalar_lea.vmem %s1, %s148
        // Predicated region
        $region25: #{tpu_custom_call.1} parent=23 // pred_check
          _
        $region26: #{tpu_custom_call.1} parent=23 // pred_check_branch
          %151 = sbr.rel target = $region28
        $region27: #{tpu_custom_call.1} parent=23 // pred_region
          // Predicated region
          $region40: #{tpu_custom_call.1} parent=27 // pred_check
            _
          $region41: #{tpu_custom_call.1} parent=27 // pred_check_branch
            %167 = sbr.rel (0) target = $region43
          $region42: #{tpu_custom_call.1} parent=27 // pred_region
            %s169 = ssub.s32 2, 1
            loop: start=0, step=1, limit=1
            $region44: #{tpu_custom_call.1} parent=42 // loop_pre_header
              _
            $region45: #{tpu_custom_call.1} parent=42 // loop_header
              %s171 = sphi 0, %s175
              %p172 = scmp.ge.s32.totalorder %s171, 1
              %s176 = sphi %s149, %s149
              %s177 = sphi [#allocation2], [#allocation2]
            $region46: #{tpu_custom_call.1} parent=42 // loop_header_branch
              %174 = sbr.rel (%p172) target = $region50
            $region47: #{tpu_custom_call.1} parent=42 // loop_body
              %v178 = vld [vmem:[%s176] sm:%s169]
              %179 = vst [vmem:[%s177] sm:%s169] %v178
            $region48: #{tpu_custom_call.1} parent=42 // loop_footer
              %s175 = sadd.s32 1, %s171
            $region49: #{tpu_custom_call.1} parent=42 // loop_footer_branch
              %170 = sbr.rel target = $region45
            $region50: #{tpu_custom_call.1} parent=42 // loop_exit
              _
          $region43: #{tpu_custom_call.1} parent=27 // pred_fallthru
            _
        $region28: #{tpu_custom_call.1} parent=23 // pred_fallthru
          _
        // Predicated region
        $region29: #{tpu_custom_call.1} parent=23 // pred_check
          _
        $region30: #{tpu_custom_call.1} parent=23 // pred_check_branch
          %153 = sbr.rel (0) target = $region32
        $region31: #{tpu_custom_call.1} parent=23 // pred_region
          %s155 = ssub.s32 2, 1
          loop: start=0, step=1, limit=1
          $region33: #{tpu_custom_call.1} parent=31 // loop_pre_header
            _
          $region34: #{tpu_custom_call.1} parent=31 // loop_header
            %s157 = sphi 0, %s161
            %p158 = scmp.ge.s32.totalorder %s157, 1
            %s162 = sphi %s149, %s149
            %s163 = sphi [#allocation2], [#allocation2]
          $region35: #{tpu_custom_call.1} parent=31 // loop_header_branch
            %160 = sbr.rel (%p158) target = $region39
          $region36: #{tpu_custom_call.1} parent=31 // loop_body
            %v164 = vld [vmem:[%s162] sm:%s155]
            %165 = vst [vmem:[%s163] sm:%s155] %v164
          $region37: #{tpu_custom_call.1} parent=31 // loop_footer
            %s161 = sadd.s32 1, %s157
          $region38: #{tpu_custom_call.1} parent=31 // loop_footer_branch
            %156 = sbr.rel target = $region34
          $region39: #{tpu_custom_call.1} parent=31 // loop_exit
            _
        $region32: #{tpu_custom_call.1} parent=23 // pred_fallthru
          _
        // Predicated region
        $region51: #{tpu_custom_call.1} parent=23 // pred_check
          _
        $region52: #{tpu_custom_call.1} parent=23 // pred_check_branch
          %182 = sbr.rel (0) target = $region54
        $region53: #{tpu_custom_call.1} parent=23 // pred_region
          %183 = vsyncadd [#allocation3], 16
        $region54: #{tpu_custom_call.1} parent=23 // pred_fallthru
          _
        %s184 = sadd.s32 %s136, 1
        %s185 = sshra.s32 %s184, 7
        %s186 = sand.u32 %s184, 127
        %s187 = sadd.s32 %s185, %s29
        %s188 = smul.u32 %s187, 128
        %s189 = sshra.s32 %s184, 7
        %s190 = sand.u32 %s184, 127
        %s191 = sadd.s32 %s188, %s190
        %s192 = sld [smem:[#allocation5 + %s191]]
        %p193 = scmp.gt.s32.totalorder %s192, 0
        %s194 = scalar_select %p193, %s192, 0
        %p195 = scmp.lt.s32.totalorder %s194, 63
        %s196 = scalar_select %p195, %s194, 63
        %s197 = scalar_lea.vmem %s1, %s196
        %s198 = scalar_lea.vmem [#allocation2], 1
        // Predicated region
        $region55: #{tpu_custom_call.1} parent=23 // pred_check
          _
        $region56: #{tpu_custom_call.1} parent=23 // pred_check_branch
          %200 = sbr.rel target = $region58
        $region57: #{tpu_custom_call.1} parent=23 // pred_region
          // Predicated region
          $region70: #{tpu_custom_call.1} parent=57 // pred_check
            _
          $region71: #{tpu_custom_call.1} parent=57 // pred_check_branch
            %216 = sbr.rel (0) target = $region73
          $region72: #{tpu_custom_call.1} parent=57 // pred_region
            %s218 = ssub.s32 2, 1
            loop: start=0, step=1, limit=1
            $region74: #{tpu_custom_call.1} parent=72 // loop_pre_header
              _
            $region75: #{tpu_custom_call.1} parent=72 // loop_header
              %s220 = sphi 0, %s224
              %p221 = scmp.ge.s32.totalorder %s220, 1
              %s225 = sphi %s197, %s197
              %s226 = sphi %s198, %s198
            $region76: #{tpu_custom_call.1} parent=72 // loop_header_branch
              %223 = sbr.rel (%p221) target = $region80
            $region77: #{tpu_custom_call.1} parent=72 // loop_body
              %v227 = vld [vmem:[%s225] sm:%s218]
              %228 = vst [vmem:[%s226] sm:%s218] %v227
            $region78: #{tpu_custom_call.1} parent=72 // loop_footer
              %s224 = sadd.s32 1, %s220
            $region79: #{tpu_custom_call.1} parent=72 // loop_footer_branch
              %219 = sbr.rel target = $region75
            $region80: #{tpu_custom_call.1} parent=72 // loop_exit
              _
          $region73: #{tpu_custom_call.1} parent=57 // pred_fallthru
            _
        $region58: #{tpu_custom_call.1} parent=23 // pred_fallthru
          _
        // Predicated region
        $region59: #{tpu_custom_call.1} parent=23 // pred_check
          _
        $region60: #{tpu_custom_call.1} parent=23 // pred_check_branch
          %202 = sbr.rel (0) target = $region62
        $region61: #{tpu_custom_call.1} parent=23 // pred_region
          %s204 = ssub.s32 2, 1
          loop: start=0, step=1, limit=1
          $region63: #{tpu_custom_call.1} parent=61 // loop_pre_header
            _
          $region64: #{tpu_custom_call.1} parent=61 // loop_header
            %s206 = sphi 0, %s210
            %p207 = scmp.ge.s32.totalorder %s206, 1
            %s211 = sphi %s197, %s197
            %s212 = sphi %s198, %s198
          $region65: #{tpu_custom_call.1} parent=61 // loop_header_branch
            %209 = sbr.rel (%p207) target = $region69
          $region66: #{tpu_custom_call.1} parent=61 // loop_body
            %v213 = vld [vmem:[%s211] sm:%s204]
            %214 = vst [vmem:[%s212] sm:%s204] %v213
          $region67: #{tpu_custom_call.1} parent=61 // loop_footer
            %s210 = sadd.s32 1, %s206
          $region68: #{tpu_custom_call.1} parent=61 // loop_footer_branch
            %205 = sbr.rel target = $region64
          $region69: #{tpu_custom_call.1} parent=61 // loop_exit
            _
        $region62: #{tpu_custom_call.1} parent=23 // pred_fallthru
          _
        // Predicated region
        $region81: #{tpu_custom_call.1} parent=23 // pred_check
          _
        $region82: #{tpu_custom_call.1} parent=23 // pred_check_branch
          %231 = sbr.rel (0) target = $region84
        $region83: #{tpu_custom_call.1} parent=23 // pred_region
          %232 = vsyncadd [#allocation3], 16
        $region84: #{tpu_custom_call.1} parent=23 // pred_fallthru
          _
        %s233 = sadd.s32 %s136, 2
        %s234 = sshra.s32 %s233, 7
        %s235 = sand.u32 %s233, 127
        %s236 = sadd.s32 %s234, %s29
        %s237 = smul.u32 %s236, 128
        %s238 = sshra.s32 %s233, 7
        %s239 = sand.u32 %s233, 127
        %s240 = sadd.s32 %s237, %s239
        %s241 = sld [smem:[#allocation5 + %s240]]
        %p242 = scmp.gt.s32.totalorder %s241, 0
        %s243 = scalar_select %p242, %s241, 0
        %p244 = scmp.lt.s32.totalorder %s243, 63
        %s245 = scalar_select %p244, %s243, 63
        %s246 = scalar_lea.vmem %s1, %s245
        %s247 = scalar_lea.vmem [#allocation2], 2
        // Predicated region
        $region85: #{tpu_custom_call.1} parent=23 // pred_check
          _
        $region86: #{tpu_custom_call.1} parent=23 // pred_check_branch
          %249 = sbr.rel target = $region88
        $region87: #{tpu_custom_call.1} parent=23 // pred_region
          // Predicated region
          $region100: #{tpu_custom_call.1} parent=87 // pred_check
            _
          $region101: #{tpu_custom_call.1} parent=87 // pred_check_branch
            %265 = sbr.rel (0) target = $region103
          $region102: #{tpu_custom_call.1} parent=87 // pred_region
            %s267 = ssub.s32 2, 1
            loop: start=0, step=1, limit=1
            $region104: #{tpu_custom_call.1} parent=102 // loop_pre_header
              _
            $region105: #{tpu_custom_call.1} parent=102 // loop_header
              %s269 = sphi 0, %s273
              %p270 = scmp.ge.s32.totalorder %s269, 1
              %s274 = sphi %s246, %s246
              %s275 = sphi %s247, %s247
            $region106: #{tpu_custom_call.1} parent=102 // loop_header_branch
              %272 = sbr.rel (%p270) target = $region110
            $region107: #{tpu_custom_call.1} parent=102 // loop_body
              %v276 = vld [vmem:[%s274] sm:%s267]
              %277 = vst [vmem:[%s275] sm:%s267] %v276
            $region108: #{tpu_custom_call.1} parent=102 // loop_footer
              %s273 = sadd.s32 1, %s269
            $region109: #{tpu_custom_call.1} parent=102 // loop_footer_branch
              %268 = sbr.rel target = $region105
            $region110: #{tpu_custom_call.1} parent=102 // loop_exit
              _
          $region103: #{tpu_custom_call.1} parent=87 // pred_fallthru
            _
        $region88: #{tpu_custom_call.1} parent=23 // pred_fallthru
          _
        // Predicated region
        $region89: #{tpu_custom_call.1} parent=23 // pred_check
          _
        $region90: #{tpu_custom_call.1} parent=23 // pred_check_branch
          %251 = sbr.rel (0) target = $region92
        $region91: #{tpu_custom_call.1} parent=23 // pred_region
          %s253 = ssub.s32 2, 1
          loop: start=0, step=1, limit=1
          $region93: #{tpu_custom_call.1} parent=91 // loop_pre_header
            _
          $region94: #{tpu_custom_call.1} parent=91 // loop_header
            %s255 = sphi 0, %s259
            %p256 = scmp.ge.s32.totalorder %s255, 1
            %s260 = sphi %s246, %s246
            %s261 = sphi %s247, %s247
          $region95: #{tpu_custom_call.1} parent=91 // loop_header_branch
            %258 = sbr.rel (%p256) target = $region99
          $region96: #{tpu_custom_call.1} parent=91 // loop_body
            %v262 = vld [vmem:[%s260] sm:%s253]
            %263 = vst [vmem:[%s261] sm:%s253] %v262
          $region97: #{tpu_custom_call.1} parent=91 // loop_footer
            %s259 = sadd.s32 1, %s255
          $region98: #{tpu_custom_call.1} parent=91 // loop_footer_branch
            %254 = sbr.rel target = $region94
          $region99: #{tpu_custom_call.1} parent=91 // loop_exit
            _
        $region92: #{tpu_custom_call.1} parent=23 // pred_fallthru
          _
        // Predicated region
        $region111: #{tpu_custom_call.1} parent=23 // pred_check
          _
        $region112: #{tpu_custom_call.1} parent=23 // pred_check_branch
          %280 = sbr.rel (0) target = $region114
        $region113: #{tpu_custom_call.1} parent=23 // pred_region
          %281 = vsyncadd [#allocation3], 16
        $region114: #{tpu_custom_call.1} parent=23 // pred_fallthru
          _
        %s282 = sadd.s32 %s136, 3
        %s283 = sshra.s32 %s282, 7
        %s284 = sand.u32 %s282, 127
        %s285 = sadd.s32 %s283, %s29
        %s286 = smul.u32 %s285, 128
        %s287 = sshra.s32 %s282, 7
        %s288 = sand.u32 %s282, 127
        %s289 = sadd.s32 %s286, %s288
        %s290 = sld [smem:[#allocation5 + %s289]]
        %p291 = scmp.gt.s32.totalorder %s290, 0
        %s292 = scalar_select %p291, %s290, 0
        %p293 = scmp.lt.s32.totalorder %s292, 63
        %s294 = scalar_select %p293, %s292, 63
        %s295 = scalar_lea.vmem %s1, %s294
        %s296 = scalar_lea.vmem [#allocation2], 3
        // Predicated region
        $region115: #{tpu_custom_call.1} parent=23 // pred_check
          _
        $region116: #{tpu_custom_call.1} parent=23 // pred_check_branch
          %298 = sbr.rel target = $region118
        $region117: #{tpu_custom_call.1} parent=23 // pred_region
          // Predicated region
          $region130: #{tpu_custom_call.1} parent=117 // pred_check
            _
          $region131: #{tpu_custom_call.1} parent=117 // pred_check_branch
            %314 = sbr.rel (0) target = $region133
          $region132: #{tpu_custom_call.1} parent=117 // pred_region
            %s316 = ssub.s32 2, 1
            loop: start=0, step=1, limit=1
            $region134: #{tpu_custom_call.1} parent=132 // loop_pre_header
              _
            $region135: #{tpu_custom_call.1} parent=132 // loop_header
              %s318 = sphi 0, %s322
              %p319 = scmp.ge.s32.totalorder %s318, 1
              %s323 = sphi %s295, %s295
              %s324 = sphi %s296, %s296
            $region136: #{tpu_custom_call.1} parent=132 // loop_header_branch
              %321 = sbr.rel (%p319) target = $region140
            $region137: #{tpu_custom_call.1} parent=132 // loop_body
              %v325 = vld [vmem:[%s323] sm:%s316]
              %326 = vst [vmem:[%s324] sm:%s316] %v325
            $region138: #{tpu_custom_call.1} parent=132 // loop_footer
              %s322 = sadd.s32 1, %s318
            $region139: #{tpu_custom_call.1} parent=132 // loop_footer_branch
              %317 = sbr.rel target = $region135
            $region140: #{tpu_custom_call.1} parent=132 // loop_exit
              _
          $region133: #{tpu_custom_call.1} parent=117 // pred_fallthru
            _
        $region118: #{tpu_custom_call.1} parent=23 // pred_fallthru
          _
        // Predicated region
        $region119: #{tpu_custom_call.1} parent=23 // pred_check
          _
        $region120: #{tpu_custom_call.1} parent=23 // pred_check_branch
          %300 = sbr.rel (0) target = $region122
        $region121: #{tpu_custom_call.1} parent=23 // pred_region
          %s302 = ssub.s32 2, 1
          loop: start=0, step=1, limit=1
          $region123: #{tpu_custom_call.1} parent=121 // loop_pre_header
            _
          $region124: #{tpu_custom_call.1} parent=121 // loop_header
            %s304 = sphi 0, %s308
            %p305 = scmp.ge.s32.totalorder %s304, 1
            %s309 = sphi %s295, %s295
            %s310 = sphi %s296, %s296
          $region125: #{tpu_custom_call.1} parent=121 // loop_header_branch
            %307 = sbr.rel (%p305) target = $region129
          $region126: #{tpu_custom_call.1} parent=121 // loop_body
            %v311 = vld [vmem:[%s309] sm:%s302]
            %312 = vst [vmem:[%s310] sm:%s302] %v311
          $region127: #{tpu_custom_call.1} parent=121 // loop_footer
            %s308 = sadd.s32 1, %s304
          $region128: #{tpu_custom_call.1} parent=121 // loop_footer_branch
            %303 = sbr.rel target = $region124
          $region129: #{tpu_custom_call.1} parent=121 // loop_exit
            _
        $region122: #{tpu_custom_call.1} parent=23 // pred_fallthru
          _
        // Predicated region
        $region141: #{tpu_custom_call.1} parent=23 // pred_check
          _
        $region142: #{tpu_custom_call.1} parent=23 // pred_check_branch
          %329 = sbr.rel (0) target = $region144
        $region143: #{tpu_custom_call.1} parent=23 // pred_region
          %330 = vsyncadd [#allocation3], 16
        $region144: #{tpu_custom_call.1} parent=23 // pred_fallthru
          _
        %s331 = sadd.s32 %s136, 4
        %s332 = sshra.s32 %s331, 7
        %s333 = sand.u32 %s331, 127
        %s334 = sadd.s32 %s332, %s29
        %s335 = smul.u32 %s334, 128
        %s336 = sshra.s32 %s331, 7
        %s337 = sand.u32 %s331, 127
        %s338 = sadd.s32 %s335, %s337
        %s339 = sld [smem:[#allocation5 + %s338]]
        %p340 = scmp.gt.s32.totalorder %s339, 0
        %s341 = scalar_select %p340, %s339, 0
        %p342 = scmp.lt.s32.totalorder %s341, 63
        %s343 = scalar_select %p342, %s341, 63
        %s344 = scalar_lea.vmem %s1, %s343
        %s345 = scalar_lea.vmem [#allocation2], 4
        // Predicated region
        $region145: #{tpu_custom_call.1} parent=23 // pred_check
          _
        $region146: #{tpu_custom_call.1} parent=23 // pred_check_branch
          %347 = sbr.rel target = $region148
        $region147: #{tpu_custom_call.1} parent=23 // pred_region
          // Predicated region
          $region160: #{tpu_custom_call.1} parent=147 // pred_check
            _
          $region161: #{tpu_custom_call.1} parent=147 // pred_check_branch
            %363 = sbr.rel (0) target = $region163
          $region162: #{tpu_custom_call.1} parent=147 // pred_region
            %s365 = ssub.s32 2, 1
            loop: start=0, step=1, limit=1
            $region164: #{tpu_custom_call.1} parent=162 // loop_pre_header
              _
            $region165: #{tpu_custom_call.1} parent=162 // loop_header
              %s367 = sphi 0, %s371
              %p368 = scmp.ge.s32.totalorder %s367, 1
              %s372 = sphi %s344, %s344
              %s373 = sphi %s345, %s345
            $region166: #{tpu_custom_call.1} parent=162 // loop_header_branch
              %370 = sbr.rel (%p368) target = $region170
            $region167: #{tpu_custom_call.1} parent=162 // loop_body
              %v374 = vld [vmem:[%s372] sm:%s365]
              %375 = vst [vmem:[%s373] sm:%s365] %v374
            $region168: #{tpu_custom_call.1} parent=162 // loop_footer
              %s371 = sadd.s32 1, %s367
            $region169: #{tpu_custom_call.1} parent=162 // loop_footer_branch
              %366 = sbr.rel target = $region165
            $region170: #{tpu_custom_call.1} parent=162 // loop_exit
              _
          $region163: #{tpu_custom_call.1} parent=147 // pred_fallthru
            _
        $region148: #{tpu_custom_call.1} parent=23 // pred_fallthru
          _
        // Predicated region
        $region149: #{tpu_custom_call.1} parent=23 // pred_check
          _
        $region150: #{tpu_custom_call.1} parent=23 // pred_check_branch
          %349 = sbr.rel (0) target = $region152
        $region151: #{tpu_custom_call.1} parent=23 // pred_region
          %s351 = ssub.s32 2, 1
          loop: start=0, step=1, limit=1
          $region153: #{tpu_custom_call.1} parent=151 // loop_pre_header
            _
          $region154: #{tpu_custom_call.1} parent=151 // loop_header
            %s353 = sphi 0, %s357
            %p354 = scmp.ge.s32.totalorder %s353, 1
            %s358 = sphi %s344, %s344
            %s359 = sphi %s345, %s345
          $region155: #{tpu_custom_call.1} parent=151 // loop_header_branch
            %356 = sbr.rel (%p354) target = $region159
          $region156: #{tpu_custom_call.1} parent=151 // loop_body
            %v360 = vld [vmem:[%s358] sm:%s351]
            %361 = vst [vmem:[%s359] sm:%s351] %v360
          $region157: #{tpu_custom_call.1} parent=151 // loop_footer
            %s357 = sadd.s32 1, %s353
          $region158: #{tpu_custom_call.1} parent=151 // loop_footer_branch
            %352 = sbr.rel target = $region154
          $region159: #{tpu_custom_call.1} parent=151 // loop_exit
            _
        $region152: #{tpu_custom_call.1} parent=23 // pred_fallthru
          _
        // Predicated region
        $region171: #{tpu_custom_call.1} parent=23 // pred_check
          _
        $region172: #{tpu_custom_call.1} parent=23 // pred_check_branch
          %378 = sbr.rel (0) target = $region174
        $region173: #{tpu_custom_call.1} parent=23 // pred_region
          %379 = vsyncadd [#allocation3], 16
        $region174: #{tpu_custom_call.1} parent=23 // pred_fallthru
          _
        %s380 = sadd.s32 %s136, 5
        %s381 = sshra.s32 %s380, 7
        %s382 = sand.u32 %s380, 127
        %s383 = sadd.s32 %s381, %s29
        %s384 = smul.u32 %s383, 128
        %s385 = sshra.s32 %s380, 7
        %s386 = sand.u32 %s380, 127
        %s387 = sadd.s32 %s384, %s386
        %s388 = sld [smem:[#allocation5 + %s387]]
        %p389 = scmp.gt.s32.totalorder %s388, 0
        %s390 = scalar_select %p389, %s388, 0
        %p391 = scmp.lt.s32.totalorder %s390, 63
        %s392 = scalar_select %p391, %s390, 63
        %s393 = scalar_lea.vmem %s1, %s392
        %s394 = scalar_lea.vmem [#allocation2], 5
        // Predicated region
        $region175: #{tpu_custom_call.1} parent=23 // pred_check
          _
        $region176: #{tpu_custom_call.1} parent=23 // pred_check_branch
          %396 = sbr.rel target = $region178
        $region177: #{tpu_custom_call.1} parent=23 // pred_region
          // Predicated region
          $region190: #{tpu_custom_call.1} parent=177 // pred_check
            _
          $region191: #{tpu_custom_call.1} parent=177 // pred_check_branch
            %412 = sbr.rel (0) target = $region193
          $region192: #{tpu_custom_call.1} parent=177 // pred_region
            %s414 = ssub.s32 2, 1
            loop: start=0, step=1, limit=1
            $region194: #{tpu_custom_call.1} parent=192 // loop_pre_header
              _
            $region195: #{tpu_custom_call.1} parent=192 // loop_header
              %s416 = sphi 0, %s420
              %p417 = scmp.ge.s32.totalorder %s416, 1
              %s421 = sphi %s393, %s393
              %s422 = sphi %s394, %s394
            $region196: #{tpu_custom_call.1} parent=192 // loop_header_branch
              %419 = sbr.rel (%p417) target = $region200
            $region197: #{tpu_custom_call.1} parent=192 // loop_body
              %v423 = vld [vmem:[%s421] sm:%s414]
              %424 = vst [vmem:[%s422] sm:%s414] %v423
            $region198: #{tpu_custom_call.1} parent=192 // loop_footer
              %s420 = sadd.s32 1, %s416
            $region199: #{tpu_custom_call.1} parent=192 // loop_footer_branch
              %415 = sbr.rel target = $region195
            $region200: #{tpu_custom_call.1} parent=192 // loop_exit
              _
          $region193: #{tpu_custom_call.1} parent=177 // pred_fallthru
            _
        $region178: #{tpu_custom_call.1} parent=23 // pred_fallthru
          _
        // Predicated region
        $region179: #{tpu_custom_call.1} parent=23 // pred_check
          _
        $region180: #{tpu_custom_call.1} parent=23 // pred_check_branch
          %398 = sbr.rel (0) target = $region182
        $region181: #{tpu_custom_call.1} parent=23 // pred_region
          %s400 = ssub.s32 2, 1
          loop: start=0, step=1, limit=1
          $region183: #{tpu_custom_call.1} parent=181 // loop_pre_header
            _
          $region184: #{tpu_custom_call.1} parent=181 // loop_header
            %s402 = sphi 0, %s406
            %p403 = scmp.ge.s32.totalorder %s402, 1
            %s407 = sphi %s393, %s393
            %s408 = sphi %s394, %s394
          $region185: #{tpu_custom_call.1} parent=181 // loop_header_branch
            %405 = sbr.rel (%p403) target = $region189
          $region186: #{tpu_custom_call.1} parent=181 // loop_body
            %v409 = vld [vmem:[%s407] sm:%s400]
            %410 = vst [vmem:[%s408] sm:%s400] %v409
          $region187: #{tpu_custom_call.1} parent=181 // loop_footer
            %s406 = sadd.s32 1, %s402
          $region188: #{tpu_custom_call.1} parent=181 // loop_footer_branch
            %401 = sbr.rel target = $region184
          $region189: #{tpu_custom_call.1} parent=181 // loop_exit
            _
        $region182: #{tpu_custom_call.1} parent=23 // pred_fallthru
          _
        // Predicated region
        $region201: #{tpu_custom_call.1} parent=23 // pred_check
          _
        $region202: #{tpu_custom_call.1} parent=23 // pred_check_branch
          %427 = sbr.rel (0) target = $region204
        $region203: #{tpu_custom_call.1} parent=23 // pred_region
          %428 = vsyncadd [#allocation3], 16
        $region204: #{tpu_custom_call.1} parent=23 // pred_fallthru
          _
        %s429 = sadd.s32 %s136, 6
        %s430 = sshra.s32 %s429, 7
        %s431 = sand.u32 %s429, 127
        %s432 = sadd.s32 %s430, %s29
        %s433 = smul.u32 %s432, 128
        %s434 = sshra.s32 %s429, 7
        %s435 = sand.u32 %s429, 127
        %s436 = sadd.s32 %s433, %s435
        %s437 = sld [smem:[#allocation5 + %s436]]
        %p438 = scmp.gt.s32.totalorder %s437, 0
        %s439 = scalar_select %p438, %s437, 0
        %p440 = scmp.lt.s32.totalorder %s439, 63
        %s441 = scalar_select %p440, %s439, 63
        %s442 = scalar_lea.vmem %s1, %s441
        %s443 = scalar_lea.vmem [#allocation2], 6
        // Predicated region
        $region205: #{tpu_custom_call.1} parent=23 // pred_check
          _
        $region206: #{tpu_custom_call.1} parent=23 // pred_check_branch
          %445 = sbr.rel target = $region208
        $region207: #{tpu_custom_call.1} parent=23 // pred_region
          // Predicated region
          $region220: #{tpu_custom_call.1} parent=207 // pred_check
            _
          $region221: #{tpu_custom_call.1} parent=207 // pred_check_branch
            %461 = sbr.rel (0) target = $region223
          $region222: #{tpu_custom_call.1} parent=207 // pred_region
            %s463 = ssub.s32 2, 1
            loop: start=0, step=1, limit=1
            $region224: #{tpu_custom_call.1} parent=222 // loop_pre_header
              _
            $region225: #{tpu_custom_call.1} parent=222 // loop_header
              %s465 = sphi 0, %s469
              %p466 = scmp.ge.s32.totalorder %s465, 1
              %s470 = sphi %s442, %s442
              %s471 = sphi %s443, %s443
            $region226: #{tpu_custom_call.1} parent=222 // loop_header_branch
              %468 = sbr.rel (%p466) target = $region230
            $region227: #{tpu_custom_call.1} parent=222 // loop_body
              %v472 = vld [vmem:[%s470] sm:%s463]
              %473 = vst [vmem:[%s471] sm:%s463] %v472
            $region228: #{tpu_custom_call.1} parent=222 // loop_footer
              %s469 = sadd.s32 1, %s465
            $region229: #{tpu_custom_call.1} parent=222 // loop_footer_branch
              %464 = sbr.rel target = $region225
            $region230: #{tpu_custom_call.1} parent=222 // loop_exit
              _
          $region223: #{tpu_custom_call.1} parent=207 // pred_fallthru
            _
        $region208: #{tpu_custom_call.1} parent=23 // pred_fallthru
          _
        // Predicated region
        $region209: #{tpu_custom_call.1} parent=23 // pred_check
          _
        $region210: #{tpu_custom_call.1} parent=23 // pred_check_branch
          %447 = sbr.rel (0) target = $region212
        $region211: #{tpu_custom_call.1} parent=23 // pred_region
          %s449 = ssub.s32 2, 1
          loop: start=0, step=1, limit=1
          $region213: #{tpu_custom_call.1} parent=211 // loop_pre_header
            _
          $region214: #{tpu_custom_call.1} parent=211 // loop_header
            %s451 = sphi 0, %s455
            %p452 = scmp.ge.s32.totalorder %s451, 1
            %s456 = sphi %s442, %s442
            %s457 = sphi %s443, %s443
          $region215: #{tpu_custom_call.1} parent=211 // loop_header_branch
            %454 = sbr.rel (%p452) target = $region219
          $region216: #{tpu_custom_call.1} parent=211 // loop_body
            %v458 = vld [vmem:[%s456] sm:%s449]
            %459 = vst [vmem:[%s457] sm:%s449] %v458
          $region217: #{tpu_custom_call.1} parent=211 // loop_footer
            %s455 = sadd.s32 1, %s451
          $region218: #{tpu_custom_call.1} parent=211 // loop_footer_branch
            %450 = sbr.rel target = $region214
          $region219: #{tpu_custom_call.1} parent=211 // loop_exit
            _
        $region212: #{tpu_custom_call.1} parent=23 // pred_fallthru
          _
        // Predicated region
        $region231: #{tpu_custom_call.1} parent=23 // pred_check
          _
        $region232: #{tpu_custom_call.1} parent=23 // pred_check_branch
          %476 = sbr.rel (0) target = $region234
        $region233: #{tpu_custom_call.1} parent=23 // pred_region
          %477 = vsyncadd [#allocation3], 16
        $region234: #{tpu_custom_call.1} parent=23 // pred_fallthru
          _
        %s478 = sadd.s32 %s136, 7
        %s479 = sshra.s32 %s478, 7
        %s480 = sand.u32 %s478, 127
        %s481 = sadd.s32 %s479, %s29
        %s482 = smul.u32 %s481, 128
        %s483 = sshra.s32 %s478, 7
        %s484 = sand.u32 %s478, 127
        %s485 = sadd.s32 %s482, %s484
        %s486 = sld [smem:[#allocation5 + %s485]]
        %p487 = scmp.gt.s32.totalorder %s486, 0
        %s488 = scalar_select %p487, %s486, 0
        %p489 = scmp.lt.s32.totalorder %s488, 63
        %s490 = scalar_select %p489, %s488, 63
        %s491 = scalar_lea.vmem %s1, %s490
        %s492 = scalar_lea.vmem [#allocation2], 7
        // Predicated region
        $region235: #{tpu_custom_call.1} parent=23 // pred_check
          _
        $region236: #{tpu_custom_call.1} parent=23 // pred_check_branch
          %494 = sbr.rel target = $region238
        $region237: #{tpu_custom_call.1} parent=23 // pred_region
          // Predicated region
          $region250: #{tpu_custom_call.1} parent=237 // pred_check
            _
          $region251: #{tpu_custom_call.1} parent=237 // pred_check_branch
            %510 = sbr.rel (0) target = $region253
          $region252: #{tpu_custom_call.1} parent=237 // pred_region
            %s512 = ssub.s32 2, 1
            loop: start=0, step=1, limit=1
            $region254: #{tpu_custom_call.1} parent=252 // loop_pre_header
              _
            $region255: #{tpu_custom_call.1} parent=252 // loop_header
              %s514 = sphi 0, %s518
              %p515 = scmp.ge.s32.totalorder %s514, 1
              %s519 = sphi %s491, %s491
              %s520 = sphi %s492, %s492
            $region256: #{tpu_custom_call.1} parent=252 // loop_header_branch
              %517 = sbr.rel (%p515) target = $region260
            $region257: #{tpu_custom_call.1} parent=252 // loop_body
              %v521 = vld [vmem:[%s519] sm:%s512]
              %522 = vst [vmem:[%s520] sm:%s512] %v521
            $region258: #{tpu_custom_call.1} parent=252 // loop_footer
              %s518 = sadd.s32 1, %s514
            $region259: #{tpu_custom_call.1} parent=252 // loop_footer_branch
              %513 = sbr.rel target = $region255
            $region260: #{tpu_custom_call.1} parent=252 // loop_exit
              _
          $region253: #{tpu_custom_call.1} parent=237 // pred_fallthru
            _
        $region238: #{tpu_custom_call.1} parent=23 // pred_fallthru
          _
        // Predicated region
        $region239: #{tpu_custom_call.1} parent=23 // pred_check
          _
        $region240: #{tpu_custom_call.1} parent=23 // pred_check_branch
          %496 = sbr.rel (0) target = $region242
        $region241: #{tpu_custom_call.1} parent=23 // pred_region
          %s498 = ssub.s32 2, 1
          loop: start=0, step=1, limit=1
          $region243: #{tpu_custom_call.1} parent=241 // loop_pre_header
            _
          $region244: #{tpu_custom_call.1} parent=241 // loop_header
            %s500 = sphi 0, %s504
            %p501 = scmp.ge.s32.totalorder %s500, 1
            %s505 = sphi %s491, %s491
            %s506 = sphi %s492, %s492
          $region245: #{tpu_custom_call.1} parent=241 // loop_header_branch
            %503 = sbr.rel (%p501) target = $region249
          $region246: #{tpu_custom_call.1} parent=241 // loop_body
            %v507 = vld [vmem:[%s505] sm:%s498]
            %508 = vst [vmem:[%s506] sm:%s498] %v507
          $region247: #{tpu_custom_call.1} parent=241 // loop_footer
            %s504 = sadd.s32 1, %s500
          $region248: #{tpu_custom_call.1} parent=241 // loop_footer_branch
            %499 = sbr.rel target = $region244
          $region249: #{tpu_custom_call.1} parent=241 // loop_exit
            _
        $region242: #{tpu_custom_call.1} parent=23 // pred_fallthru
          _
        // Predicated region
        $region261: #{tpu_custom_call.1} parent=23 // pred_check
          _
        $region262: #{tpu_custom_call.1} parent=23 // pred_check_branch
          %525 = sbr.rel (0) target = $region264
        $region263: #{tpu_custom_call.1} parent=23 // pred_region
          %526 = vsyncadd [#allocation3], 16
        $region264: #{tpu_custom_call.1} parent=23 // pred_fallthru
          _
        %s527 = smul.u32 1, 1
        %s528 = sshll.u32 %s527, 4
        %529 = dma.done [#allocation3], %s528
        %s530 = sshll.u32 %s527, 4
        %531 = dma.done [#allocation3], %s530
        %s532 = sshll.u32 %s527, 4
        %533 = dma.done [#allocation3], %s532
        %s534 = sshll.u32 %s527, 4
        %535 = dma.done [#allocation3], %s534
        %s536 = sshll.u32 %s527, 4
        %537 = dma.done [#allocation3], %s536
        %s538 = sshll.u32 %s527, 4
        %539 = dma.done [#allocation3], %s538
        %s540 = sshll.u32 %s527, 4
        %541 = dma.done [#allocation3], %s540
        %s542 = sshll.u32 %s527, 4
        %543 = dma.done [#allocation3], %s542
        %v544 = vld [vmem:[#allocation2] sm:$0xff]
        %v545 = vmul.f32 %v544, 5.656854
        %v546 = vld [vmem:[%s135] sm:$0xff]
        %v547 = vadd.f32 %v545, %v546
        %vm548 = vcmask 261120
        %549 = vst.msk [vmem:[%s131] sm:$0xff] %vm548, %v547
        %s550 = sand.u32 %s73, 1
        %s551 = scalar_lea.sflag [#allocation7], %s550
        %s552 = sand.u32 %s73, 1
        %s553 = smul.addr %s552, 8
        %s554 = scalar_lea.vmem [#allocation6], %s553
        // Predicated region
        $region265: #{tpu_custom_call.1} parent=23 // pred_check
          %p555 = pneg %p83
        $region266: #{tpu_custom_call.1} parent=23 // pred_check_branch
          %557 = sbr.rel (%p555) target = $region268
        $region267: #{tpu_custom_call.1} parent=23 // pred_region
          %559 = vsyncadd %s551, 0
          %s560 = sadd.s32 %s30, %s29
          %s561 = smul.addr %s560, 8
          %s562 = scalar_lea.hbm %s3, %s561
          %s564 = sshll.u32 %s554, 4
          %s565 = int_to_ptr.vmem [resolvable:$true] %s564
          %s566 = sshll.u32 %s562, 4
          %s567 = int_to_ptr.hbm [resolvable:$true] %s566
          %569 = dma.vmem_to_hbm [thread:$0]  %s565, 128, %s567, %s551
        $region268: #{tpu_custom_call.1} parent=23 // pred_fallthru
          _
      $region24: #{tpu_custom_call.1} parent=5 // pred_fallthru
        _
      %p570 = scmp.le.s32.totalorder 2, %s20
      // Predicated region
      $region269: #{tpu_custom_call.1} parent=5 // pred_check
        %p571 = pneg %p570
      $region270: #{tpu_custom_call.1} parent=5 // pred_check_branch
        %573 = sbr.rel (%p571) target = $region272
      $region271: #{tpu_custom_call.1} parent=5 // pred_region
        %s574 = ssub.s32 %s20, 2
        // Predicated region
        $region273: #{tpu_custom_call.1} parent=271 // pred_check
          %p575 = pneg %p89
        $region274: #{tpu_custom_call.1} parent=271 // pred_check_branch
          %577 = sbr.rel (%p575) target = $region276
        $region275: #{tpu_custom_call.1} parent=271 // pred_region
          %s578 = sand.u32 %s74, 1
          %s579 = scalar_lea.sflag [#allocation7], %s578
          %s580 = sand.u32 %s74, 1
          %s581 = smul.addr %s580, 8
          %s582 = scalar_lea.vmem [#allocation6], %s581
          %584 = dma.done %s579, 128
        $region276: #{tpu_custom_call.1} parent=271 // pred_fallthru
          _
      $region272: #{tpu_custom_call.1} parent=5 // pred_fallthru
        _
    $region6: #{tpu_custom_call.1} parent=1 // loop_footer
      %s24 = sadd.s32 1, %s20
    $region7: #{tpu_custom_call.1} parent=1 // loop_footer_branch
      %19 = sbr.rel target = $region3
    $region8: #{tpu_custom_call.1} parent=1 // loop_exit
      _
    %585 = vsyncpa [#allocation7], 1
    %s586 = scalar_lea.sflag [#allocation7], 1
    %587 = vsyncpa %s586, 1
  %588 = vsyncmov [#allocation3]
  %s589 = vpop.sfrf %588
  %p590 = scmp.eq.s32.totalorder %s589, 0
  %p591 = pneg %p590
  %593 = shalt.err (%p591)

</llo_original>
